<compile_context>
chip_gen: v7x
topology: tpu7x:2x2x1
jax: 0.10.0
libtpu: 0.0.40
codegen_flags: <defaults>
</compile_context>

<pallas_src>
import math
import functools

import jax
import jax.numpy as jnp
from jax import lax
from jax.experimental import pallas as pl
from jax.experimental.pallas import tpu as pltpu


def _round_up(x, m):
    return ((x + m - 1) // m) * m


def token_embedding_kernel(ids_ref, table_ref, out_ref, acc_ref, *, scale,
                           vocab_block):
    # ids_ref   : VMEM (TB, 1)  int32 -- this token block's ids (same across k)
    # table_ref : VMEM (TV, E)  f32   -- this vocab chunk of the table
    # out_ref   : VMEM (TB, E)  f32   -- this token block's output tile
    # acc_ref   : VMEM (TB, E)  f32   -- resident accumulator across vocab axis
    k = pl.program_id(1)

    @pl.when(k == 0)
    def _():
        acc_ref[...] = jnp.zeros_like(acc_ref)

    ids = ids_ref[...]                                  # (TB, 1) int32
    tb = ids.shape[0]

    # Local (chunk-relative) ids; rows whose id falls outside this vocab chunk
    # (including tail padding / OOB ids) get an all-zero one-hot row, so the
    # gather never reads out of range.
    local = ids - k * vocab_block                       # (TB, 1)
    col = lax.broadcasted_iota(jnp.int32, (tb, vocab_block), 1)
    one_hot = jnp.where(col == local, scale, 0.0).astype(jnp.float32)

    # MXU matmul does gather + sqrt(E) scaling for this vocab chunk.
    acc_ref[...] += jnp.dot(
        one_hot,
        table_ref[...],
        preferred_element_type=jnp.float32,
        precision=lax.Precision.HIGHEST,
    )

    @pl.when(k == pl.num_programs(1) - 1)
    def _():
        out_ref[...] = acc_ref[...].astype(out_ref.dtype)


def token_embedding(tokens, table, *, tokens_per_block=256, vocab_per_block=512):
    """tokens: (S, B) integer ids, table: (V, E) f32 -> (S, B, E) f32."""
    S, B = tokens.shape
    V, E = table.shape
    N = S * B

    # Big token tiles amortize per-step pipeline overhead; cap at (8-aligned) N
    # for tiny inputs so we don't compute far more rows than needed.
    tb = min(tokens_per_block, _round_up(N, 8))
    tb = _round_up(tb, 8)
    n_pad = _round_up(N, tb)

    # Vocab chunk size: keeps the (TB, TV) one-hot and the (TV, E) table block
    # comfortably inside VMEM while the table streams from HBM.
    tv = min(vocab_per_block, _round_up(V, 8))
    tv = _round_up(tv, 8)
    v_pad = _round_up(V, tv)

    flat_ids = tokens.reshape(N).astype(jnp.int32)
    # Pad with an out-of-range id so padded rows come out all-zero.
    flat_ids = jnp.pad(flat_ids, (0, n_pad - N), constant_values=v_pad)
    flat_ids = flat_ids.reshape(n_pad, 1)

    table_p = table if v_pad == V else jnp.pad(table, ((0, v_pad - V), (0, 0)))

    scale = float(math.sqrt(E))
    kernel = functools.partial(token_embedding_kernel, scale=scale,
                               vocab_block=tv)

    out_flat = pl.pallas_call(
        kernel,
        out_shape=jax.ShapeDtypeStruct((n_pad, E), table.dtype),
        grid=(n_pad // tb, v_pad // tv),
        in_specs=[
            # token-id tile: same block across the vocab axis (no re-DMA)
            pl.BlockSpec((tb, 1), lambda i, k: (i, 0)),
            # table chunk: streamed / double-buffered along the vocab axis
            pl.BlockSpec((tv, E), lambda i, k: (k, 0)),
        ],
        out_specs=pl.BlockSpec((tb, E), lambda i, k: (i, 0)),
        scratch_shapes=[pltpu.VMEM((tb, E), jnp.float32)],
        compiler_params=pltpu.CompilerParams(
            # disjoint output tiles along axis 0 -> parallel (megacore);
            # vocab axis is a reduction -> arbitrary, and is the last axis.
            dimension_semantics=("parallel", "arbitrary"),
        ),
    )(flat_ids, table_p)

    return out_flat[:N].reshape(S, B, E)


if __name__ == "__main__":
    key = jax.random.PRNGKey(0)
    vocab_size, emb_size = 64, 128
    seq_len, batch = 8, 2

    k_table, k_tok = jax.random.split(key)
    # deterministic synthetic "nn.Embedding.weight" (vocab_size, emb_size)
    table = jax.random.normal(k_table, (vocab_size, emb_size), dtype=jnp.float32)
    tokens = jax.random.randint(
        k_tok, (seq_len, batch), 0, vocab_size, dtype=jnp.int32
    )

    out = jax.block_until_ready(token_embedding(tokens, table))

    # reference: embedding lookup * sqrt(emb_size)
    ref = (
        jnp.take(table, tokens.reshape(-1), axis=0).reshape(seq_len, batch, emb_size)
        * math.sqrt(emb_size)
    )
    assert out.shape == (seq_len, batch, emb_size)
    assert out.dtype == jnp.float32
    max_err = float(jnp.max(jnp.abs(out - ref)))
    assert jnp.allclose(out, ref, atol=1e-3, rtol=1e-3), f"max_err={max_err}"

    print("KERNEL_OK")
</pallas_src>

<mosaic_0001>
module attributes {stable_mosaic.version = 11 : i64} {
  func.func @token_embedding_kernel(%arg0: i32, %arg1: i32, %arg2: memref<16x1xi32, #tpu.memory_space<vmem>>, %arg3: memref<64x128xf32, #tpu.memory_space<vmem>>, %arg4: memref<16x128xf32, #tpu.memory_space<vmem>>, %arg5: memref<16x128xf32, #tpu.memory_space<vmem>>) attributes {dimension_semantics = [#tpu.dimension_semantics<parallel>, #tpu.dimension_semantics<arbitrary>], iteration_bounds = array<i64: 1, 1>, scalar_prefetch = 0 : i64, scratch_operands = 1 : i64, tpu.core_type = #tpu.core_type<tc>, window_params = [{transform_indices = @transform_0, window_bounds = array<i64: 16, 1>}, {transform_indices = @transform_1, window_bounds = array<i64: 64, 128>}, {transform_indices = @transform_2, window_bounds = array<i64: 16, 128>}]} {
    %c0_i32 = arith.constant 0 : i32
    %0 = arith.cmpi eq, %arg1, %c0_i32 : i32
    %1 = arith.extui %0 : i1 to i32
    %c0_i32_0 = arith.constant 0 : i32
    %2 = arith.cmpi ne, %1, %c0_i32_0 : i32
    scf.if %2 {
      %cst_12 = arith.constant 0.000000e+00 : f32
      %21 = vector.broadcast %cst_12 : f32 to vector<16x128xf32>
      %c0_13 = arith.constant 0 : index
      %c0_14 = arith.constant 0 : index
      %22 = vector.load %arg5[%c0_13, %c0_14] : memref<16x128xf32, #tpu.memory_space<vmem>>, vector<16x128xf32>
      tpu.vector_store %arg5[%c0_13, %c0_14], %21 {strides = array<i32>} : memref<16x128xf32, #tpu.memory_space<vmem>>, vector<16x128xf32>,
    } else {
    }
    %c0 = arith.constant 0 : index
    %c0_1 = arith.constant 0 : index
    %3 = vector.load %arg2[%c0, %c0_1] : memref<16x1xi32, #tpu.memory_space<vmem>>, vector<16x1xi32>
    %c64_i32 = arith.constant 64 : i32
    %4 = arith.muli %arg1, %c64_i32 : i32
    %5 = vector.broadcast %4 : i32 to vector<16x1xi32>
    %6 = arith.subi %3, %5 : vector<16x1xi32>
    %7 = tpu.iota {dimensions = array<i32: 1>} : vector<16x64xi32>
    %8 = vector.broadcast %6 : vector<16x1xi32> to vector<16x64xi32>
    %9 = arith.cmpi eq, %7, %8 : vector<16x64xi32>
    %cst = arith.constant 11.3137083 : f32
    %cst_2 = arith.constant 0.000000e+00 : f32
    %10 = vector.broadcast %cst : f32 to vector<16x64xf32>
    %11 = vector.broadcast %cst_2 : f32 to vector<16x64xf32>
    %12 = arith.select %9, %10, %11 : vector<16x64xi1>, vector<16x64xf32>
    %c0_3 = arith.constant 0 : index
    %c0_4 = arith.constant 0 : index
    %13 = vector.load %arg5[%c0_3, %c0_4] : memref<16x128xf32, #tpu.memory_space<vmem>>, vector<16x128xf32>
    %c0_5 = arith.constant 0 : index
    %c0_6 = arith.constant 0 : index
    %14 = vector.load %arg3[%c0_5, %c0_6] : memref<64x128xf32, #tpu.memory_space<vmem>>, vector<64x128xf32>
    %cst_7 = arith.constant dense<0.000000e+00> : vector<16x128xf32>
    %15 = tpu.matmul %12, %14, %cst_7 {dimension_numbers = #tpu.dot_dimension_numbers<[1], [0], [0], [1], [0, 0, 1, 1], [], []>, precision = #tpu.contract_precision<fp32>} : vector<16x64xf32>, vector<64x128xf32>, vector<16x128xf32> -> vector<16x128xf32>
    %16 = arith.addf %13, %15 : vector<16x128xf32>
    %c0_8 = arith.constant 0 : index
    %c0_9 = arith.constant 0 : index
    %17 = vector.load %arg5[%c0_8, %c0_9] : memref<16x128xf32, #tpu.memory_space<vmem>>, vector<16x128xf32>
    tpu.vector_store %arg5[%c0_8, %c0_9], %16 {strides = array<i32>} : memref<16x128xf32, #tpu.memory_space<vmem>>, vector<16x128xf32>,
    %c0_i32_10 = arith.constant 0 : i32
    %18 = arith.cmpi eq, %arg1, %c0_i32_10 : i32
    %19 = arith.extui %18 : i1 to i32
    %c0_i32_11 = arith.constant 0 : i32
    %20 = arith.cmpi ne, %19, %c0_i32_11 : i32
    scf.if %20 {
      %c0_12 = arith.constant 0 : index
      %c0_13 = arith.constant 0 : index
      %21 = vector.load %arg5[%c0_12, %c0_13] : memref<16x128xf32, #tpu.memory_space<vmem>>, vector<16x128xf32>
      %c0_14 = arith.constant 0 : index
      %c0_15 = arith.constant 0 : index
      %22 = vector.load %arg4[%c0_14, %c0_15] : memref<16x128xf32, #tpu.memory_space<vmem>>, vector<16x128xf32>
      tpu.vector_store %arg4[%c0_14, %c0_15], %21 {strides = array<i32>} : memref<16x128xf32, #tpu.memory_space<vmem>>, vector<16x128xf32>,
    } else {
    }
    return
  }
  func.func @transform_0(%arg0: i32, %arg1: i32) -> (i32, i32) {
    %c0_i32 = arith.constant 0 : i32
    %c0_i32_0 = arith.constant 0 : i32
    return %arg0, %c0_i32 : i32, i32
  }
  func.func @transform_1(%arg0: i32, %arg1: i32) -> (i32, i32) {
    %c0_i32 = arith.constant 0 : i32
    %c0_i32_0 = arith.constant 0 : i32
    return %arg1, %c0_i32 : i32, i32
  }
  func.func @transform_2(%arg0: i32, %arg1: i32) -> (i32, i32) {
    %c0_i32 = arith.constant 0 : i32
    %c0_i32_0 = arith.constant 0 : i32
    return %arg0, %c0_i32 : i32, i32
  }
}

</mosaic_0001>

<llo_original>
// kernel: tpu_custom_call.1
$region0: #{tpu_custom_call.1}
  #allocation0 [shape = 'u32[]', space=smem, size = 0x4, offset = 0x4, fixed_abs, tag = 'smem constant byte address 0x4 - core index']
  #allocation1 [shape = 'u32[144,128]{1,0:T(1,128)}', space=vmem, size = 0x12000, scoped, tag = 'internal scratch']
  #allocation2 [shape = 'f32[16,128]{1,0:T(8,128)}', space=vmem, size = 0x2000, scoped, tag = 'scratch operand']
  %s0 = inlined_call_operand.vmem [shape: s32[16,1], index: 0, kind: input, shape index: {}]
  %s1 = inlined_call_operand.hbm [shape: f32[64,128], index: 1, kind: input, shape index: {}]
  %s2 = inlined_call_operand.hbm [shape: f32[16,128], index: 2, kind: output, shape index: {}]
  %s3 = sld [smem:[#allocation0]]
  $region30: #{tpu_custom_call.1} parent=0
    _
  %s5 = ssub.s32 1, %s3
  %s6 = scalar_select 0, %s5, %s3
  $region1: #{tpu_custom_call.1} parent=0
    #allocation3 [shape = 'u8[32768]{0}', space=vmem, size = 0x8000, scoped, tag = 'input window, operand 1, single buffered']
    #allocation4 [shape = 's32[1]{0}', space=sflag, size = 0x4, scoped, tag = 'scoped memory for tpu_custom_call.1']
    #allocation5 [shape = 's32[1]{0}', space=sflag, size = 0x4, scoped, tag = 'scoped memory for tpu_custom_call.1']
    #allocation6 [shape = 'u8[8192]{0}', space=vmem, size = 0x2000, scoped, tag = 'output window, operand 0, single buffered']
    %7 = vsyncpa [#allocation4], 0
    %8 = vsyncpa [#allocation5], 0
    // Predicated region
    $region2: #{tpu_custom_call.1} parent=1 // pred_check
      _
    $region3: #{tpu_custom_call.1} parent=1 // pred_check_branch
      %10 = sbr.rel (0) target = $region5
    $region4: #{tpu_custom_call.1} parent=1 // pred_region
      _
    $region5: #{tpu_custom_call.1} parent=1 // pred_fallthru
      _
    // Predicated region
    $region6: #{tpu_custom_call.1} parent=1 // pred_check
      _
    $region7: #{tpu_custom_call.1} parent=1 // pred_check_branch
      %12 = sbr.rel (0) target = $region9
    $region8: #{tpu_custom_call.1} parent=1 // pred_region
      %s14 = ssub.s32 1024, 1024
      %15 = vsyncadd [#allocation4], %s14
      %s16 = sshll.u32 [#allocation3], 4
      %s17 = int_to_ptr.vmem [resolvable:$true] %s16
      %22 = dma.hbm_to_vmem [thread:$0]  %s1, 1024, %s17, [#allocation4], 128, 128, 8
    $region9: #{tpu_custom_call.1} parent=1 // pred_fallthru
      _
    // Predicated region
    $region10: #{tpu_custom_call.1} parent=1 // pred_check
      _
    $region11: #{tpu_custom_call.1} parent=1 // pred_check_branch
      %24 = sbr.rel (0) target = $region13
    $region12: #{tpu_custom_call.1} parent=1 // pred_region
      %25 = dma.done [#allocation4], 1024
    $region13: #{tpu_custom_call.1} parent=1 // pred_fallthru
      _
    %p26 = scmp.eq.s32.totalorder 0, 0
    // Predicated region
    $region14: #{tpu_custom_call.1} parent=1 // pred_check
      %p27 = pneg %p26
    $region15: #{tpu_custom_call.1} parent=1 // pred_check_branch
      %29 = sbr.rel (%p27) target = $region17
    $region16: #{tpu_custom_call.1} parent=1 // pred_region
      %30 = vst [vmem:[#allocation2] sm:$0xff] 0.0
      %31 = vst [vmem:[#allocation2 + $0x8] sm:$0xff] 0.0
    $region17: #{tpu_custom_call.1} parent=1 // pred_fallthru
      _
    %v32 = vld [vmem:[%s0] sm:$0xff]
    %v33 = vld [vmem:[%s0 + $0x8] sm:$0xff]
    %s34 = smul.u32 0, 64
    %v35 = vstv %s34
    %v36 = vsub.s32 %v32, %v35
    %v37 = vsub.s32 %v33, %v35
    %v38 = vlaneseq
    %v39 = vand.u32 %v38, 127
    %40 = vset.pattern.permute.xlu0 0
    %41 = vperm.xlu0 %40, %v36
    %v42 = vpop.permute.xlu0 %41
    %43 = vset.pattern.permute.xlu0 0
    %44 = vperm.xlu0 %43, %v37
    %v45 = vpop.permute.xlu0 %44
    %vm46 = vcmp.eq.s32.totalorder %v39, %v42
    %vm47 = vcmp.eq.s32.totalorder %v39, %v45
    %v48 = vsel %vm46, 11.313708, 0.0
    %v49 = vsel %vm47, 11.313708, 0.0
    %v50 = vld [vmem:[#allocation2] sm:$0xff]
    %v51 = vld [vmem:[#allocation2 + $0x8] sm:$0xff]
    %v52 = vld [vmem:[#allocation3] sm:$0xff]
    %v53 = vld [vmem:[#allocation3 + $0x8] sm:$0xff]
    %v54 = vld [vmem:[#allocation3 + $0x10] sm:$0xff]
    %v55 = vld [vmem:[#allocation3 + $0x18] sm:$0xff]
    %v56 = vld [vmem:[#allocation3 + $0x20] sm:$0xff]
    %v57 = vld [vmem:[#allocation3 + $0x28] sm:$0xff]
    %v58 = vld [vmem:[#allocation3 + $0x30] sm:$0xff]
    %v59 = vld [vmem:[#allocation3 + $0x38] sm:$0xff]
    %vm60 = vcmask 523264
    %v62 = vsel %vm60, %v48, 0
    %v65 = vsel %vm60, %v49, 0
    %67 = vmatprep.subr.mxu0 0.0
    %v68 = vand.u32 %v52, 4294901760
    %69 = vmatpush1.msra.mxu0 %v68
    %70 = vmatprep.subr.mxu0 0.0
    %v71 = vand.u32 %v53, 4294901760
    %72 = vmatpush1.msra.mxu0 %v71
    %73 = vmatprep.subr.mxu0 0.0
    %v74 = vand.u32 %v54, 4294901760
    %75 = vmatpush1.msra.mxu0 %v74
    %76 = vmatprep.subr.mxu0 0.0
    %v77 = vand.u32 %v55, 4294901760
    %78 = vmatpush1.msra.mxu0 %v77
    %79 = vmatprep.subr.mxu0 0.0
    %v80 = vand.u32 %v56, 4294901760
    %81 = vmatpush1.msra.mxu0 %v80
    %82 = vmatprep.subr.mxu0 0.0
    %v83 = vand.u32 %v57, 4294901760
    %84 = vmatpush1.msra.mxu0 %v83
    %85 = vmatprep.subr.mxu0 0.0
    %v86 = vand.u32 %v58, 4294901760
    %87 = vmatpush1.msra.mxu0 %v86
    %88 = vmatprep.subr.mxu0 0.0
    %v89 = vand.u32 %v59, 4294901760
    %90 = vmatpush1.msra.mxu0 %v89
    %91 = vmatprep.subr.mxu0 0.0
    %92 = vmatpush1.msra.mxu0 0.0
    %93 = vmatprep.subr.mxu0 0.0
    %94 = vmatpush1.msra.mxu0 0.0
    %95 = vmatprep.subr.mxu0 0.0
    %96 = vmatpush1.msra.mxu0 0.0
    %97 = vmatprep.subr.mxu0 0.0
    %98 = vmatpush1.msra.mxu0 0.0
    %99 = vmatprep.subr.mxu0 0.0
    %100 = vmatpush1.msra.mxu0 0.0
    %101 = vmatprep.subr.mxu0 0.0
    %102 = vmatpush1.msra.mxu0 0.0
    %103 = vmatprep.subr.mxu0 0.0
    %104 = vmatpush1.msra.mxu0 0.0
    %105 = vmatprep.subr.mxu0 0.0
    %106 = vmatpush1.msra.mxu0 0.0
    %107 = vmatprep.subr.mxu0 0.0
    %108 = vmatpush1.msra.mxu0 0.0
    %109 = vmatprep.subr.mxu0 0.0
    %110 = vmatpush1.msra.mxu0 0.0
    %111 = vmatprep.subr.mxu0 0.0
    %112 = vmatpush1.msra.mxu0 0.0
    %113 = vmatprep.subr.mxu0 0.0
    %114 = vmatpush1.msra.mxu0 0.0
    %115 = vmatprep.subr.mxu0 0.0
    %116 = vmatpush1.msra.mxu0 0.0
    %117 = vmatprep.subr.mxu0 0.0
    %118 = vmatpush1.msra.mxu0 0.0
    %119 = vmatprep.subr.mxu0 0.0
    %120 = vmatpush1.msra.mxu0 0.0
    %121 = vmatprep.subr.mxu0 0.0
    %122 = vmatpush1.msra.mxu0 0.0
    %123 = vmatprep.subr.mxu0 0.0
    %124 = vmatpush1.msra.mxu0 0.0
    %125 = vmatprep.subr.mxu0 0.0
    %126 = vmatpush1.msra.mxu0 0.0
    %127 = vmatprep.subr.mxu0 0.0
    %128 = vmatpush1.msra.mxu0 0.0
    %129 = vmatprep.subr.mxu0 0.0
    %130 = vmatpush1.msra.mxu0 0.0
    %131 = vmatprep.subr.mxu0 0.0
    %132 = vmatpush1.msra.mxu0 0.0
    %133 = vmatprep.subr.mxu0 0.0
    %134 = vmatpush1.msra.mxu0 0.0
    %135 = vmatprep.subr.mxu0 0.0
    %136 = vmatpush1.msra.mxu0 0.0
    %137 = vmatprep.subr.mxu0 0.0
    %138 = vmatpush1.msra.mxu0 0.0
    %139 = vmatprep.mubr.f32.mxu0 0.0
    %v140 = vand.u32 %v62, 4294901760
    %v141 = vsub.f32 %v62, %v140
    %v142 = vand.u32 %v141, 4294901760
    %v143 = vsub.f32 %v141, %v142
    %v144 = vand.u32 %v143, 4294901760
    %145 = vmatmul.mubr.f32.gmra.mrb[0].mxu0 %v144
    %v146 = vpop.f32.mrb[0].mxu0
    %v147 = vadd.f32 0.0, %v146
    %v148 = vpop.f32.mrb[0].mxu0
    %149 = vmatprep.mubr.f32.mxu0 0.0
    %v150 = vand.u32 %v65, 4294901760
    %v151 = vsub.f32 %v65, %v150
    %v152 = vand.u32 %v151, 4294901760
    %v153 = vsub.f32 %v151, %v152
    %v154 = vand.u32 %v153, 4294901760
    %155 = vmatmul.mubr.f32.gmra.mrb[0].mxu0 %v154
    %v156 = vpop.f32.mrb[0].mxu0
    %v157 = vadd.f32 0.0, %v156
    %v158 = vpop.f32.mrb[0].mxu0
    %159 = vdwg.mxu0
    %160 = vmatprep.subr.mxu0 0.0
    %v161 = vand.u32 %v52, 4294901760
    %v162 = vsub.f32 %v52, %v161
    %v163 = vand.u32 %v162, 4294901760
    %v164 = vsub.f32 %v162, %v163
    %v165 = vand.u32 %v164, 4294901760
    %166 = vmatpush1.msra.mxu0 %v165
    %167 = vmatprep.subr.mxu0 0.0
    %v168 = vand.u32 %v53, 4294901760
    %v169 = vsub.f32 %v53, %v168
    %v170 = vand.u32 %v169, 4294901760
    %v171 = vsub.f32 %v169, %v170
    %v172 = vand.u32 %v171, 4294901760
    %173 = vmatpush1.msra.mxu0 %v172
    %174 = vmatprep.subr.mxu0 0.0
    %v175 = vand.u32 %v54, 4294901760
    %v176 = vsub.f32 %v54, %v175
    %v177 = vand.u32 %v176, 4294901760
    %v178 = vsub.f32 %v176, %v177
    %v179 = vand.u32 %v178, 4294901760
    %180 = vmatpush1.msra.mxu0 %v179
    %181 = vmatprep.subr.mxu0 0.0
    %v182 = vand.u32 %v55, 4294901760
    %v183 = vsub.f32 %v55, %v182
    %v184 = vand.u32 %v183, 4294901760
    %v185 = vsub.f32 %v183, %v184
    %v186 = vand.u32 %v185, 4294901760
    %187 = vmatpush1.msra.mxu0 %v186
    %188 = vmatprep.subr.mxu0 0.0
    %v189 = vand.u32 %v56, 4294901760
    %v190 = vsub.f32 %v56, %v189
    %v191 = vand.u32 %v190, 4294901760
    %v192 = vsub.f32 %v190, %v191
    %v193 = vand.u32 %v192, 4294901760
    %194 = vmatpush1.msra.mxu0 %v193
    %195 = vmatprep.subr.mxu0 0.0
    %v196 = vand.u32 %v57, 4294901760
    %v197 = vsub.f32 %v57, %v196
    %v198 = vand.u32 %v197, 4294901760
    %v199 = vsub.f32 %v197, %v198
    %v200 = vand.u32 %v199, 4294901760
    %201 = vmatpush1.msra.mxu0 %v200
    %202 = vmatprep.subr.mxu0 0.0
    %v203 = vand.u32 %v58, 4294901760
    %v204 = vsub.f32 %v58, %v203
    %v205 = vand.u32 %v204, 4294901760
    %v206 = vsub.f32 %v204, %v205
    %v207 = vand.u32 %v206, 4294901760
    %208 = vmatpush1.msra.mxu0 %v207
    %209 = vmatprep.subr.mxu0 0.0
    %v210 = vand.u32 %v59, 4294901760
    %v211 = vsub.f32 %v59, %v210
    %v212 = vand.u32 %v211, 4294901760
    %v213 = vsub.f32 %v211, %v212
    %v214 = vand.u32 %v213, 4294901760
    %215 = vmatpush1.msra.mxu0 %v214
    %216 = vmatprep.subr.mxu0 0.0
    %217 = vmatpush1.msra.mxu0 0.0
    %218 = vmatprep.subr.mxu0 0.0
    %219 = vmatpush1.msra.mxu0 0.0
    %220 = vmatprep.subr.mxu0 0.0
    %221 = vmatpush1.msra.mxu0 0.0
    %222 = vmatprep.subr.mxu0 0.0
    %223 = vmatpush1.msra.mxu0 0.0
    %224 = vmatprep.subr.mxu0 0.0
    %225 = vmatpush1.msra.mxu0 0.0
    %226 = vmatprep.subr.mxu0 0.0
    %227 = vmatpush1.msra.mxu0 0.0
    %228 = vmatprep.subr.mxu0 0.0
    %229 = vmatpush1.msra.mxu0 0.0
    %230 = vmatprep.subr.mxu0 0.0
    %231 = vmatpush1.msra.mxu0 0.0
    %232 = vmatprep.subr.mxu0 0.0
    %233 = vmatpush1.msra.mxu0 0.0
    %234 = vmatprep.subr.mxu0 0.0
    %235 = vmatpush1.msra.mxu0 0.0
    %236 = vmatprep.subr.mxu0 0.0
    %237 = vmatpush1.msra.mxu0 0.0
    %238 = vmatprep.subr.mxu0 0.0
    %239 = vmatpush1.msra.mxu0 0.0
    %240 = vmatprep.subr.mxu0 0.0
    %241 = vmatpush1.msra.mxu0 0.0
    %242 = vmatprep.subr.mxu0 0.0
    %243 = vmatpush1.msra.mxu0 0.0
    %244 = vmatprep.subr.mxu0 0.0
    %245 = vmatpush1.msra.mxu0 0.0
    %246 = vmatprep.subr.mxu0 0.0
    %247 = vmatpush1.msra.mxu0 0.0
    %248 = vmatprep.subr.mxu0 0.0
    %249 = vmatpush1.msra.mxu0 0.0
    %250 = vmatprep.subr.mxu0 0.0
    %251 = vmatpush1.msra.mxu0 0.0
    %252 = vmatprep.subr.mxu0 0.0
    %253 = vmatpush1.msra.mxu0 0.0
    %254 = vmatprep.subr.mxu0 0.0
    %255 = vmatpush1.msra.mxu0 0.0
    %256 = vmatprep.subr.mxu0 0.0
    %257 = vmatpush1.msra.mxu0 0.0
    %258 = vmatprep.subr.mxu0 0.0
    %259 = vmatpush1.msra.mxu0 0.0
    %260 = vmatprep.subr.mxu0 0.0
    %261 = vmatpush1.msra.mxu0 0.0
    %262 = vmatprep.subr.mxu0 0.0
    %263 = vmatpush1.msra.mxu0 0.0
    %264 = vmatprep.mubr.f32.mxu0 0.0
    %v265 = vand.u32 %v62, 4294901760
    %266 = vmatmul.mubr.f32.gmra.mrb[0].mxu0 %v265
    %v267 = vpop.f32.mrb[0].mxu0
    %v268 = vadd.f32 %v147, %v267
    %v269 = vpop.f32.mrb[0].mxu0
    %270 = vmatprep.mubr.f32.mxu0 0.0
    %v271 = vand.u32 %v65, 4294901760
    %272 = vmatmul.mubr.f32.gmra.mrb[0].mxu0 %v271
    %v273 = vpop.f32.mrb[0].mxu0
    %v274 = vadd.f32 %v157, %v273
    %v275 = vpop.f32.mrb[0].mxu0
    %276 = vdwg.mxu0
    %277 = vmatprep.subr.mxu0 0.0
    %v278 = vand.u32 %v52, 4294901760
    %v279 = vsub.f32 %v52, %v278
    %280 = vmatpush1.msra.mxu0 %v279
    %281 = vmatprep.subr.mxu0 0.0
    %v282 = vand.u32 %v53, 4294901760
    %v283 = vsub.f32 %v53, %v282
    %284 = vmatpush1.msra.mxu0 %v283
    %285 = vmatprep.subr.mxu0 0.0
    %v286 = vand.u32 %v54, 4294901760
    %v287 = vsub.f32 %v54, %v286
    %288 = vmatpush1.msra.mxu0 %v287
    %289 = vmatprep.subr.mxu0 0.0
    %v290 = vand.u32 %v55, 4294901760
    %v291 = vsub.f32 %v55, %v290
    %292 = vmatpush1.msra.mxu0 %v291
    %293 = vmatprep.subr.mxu0 0.0
    %v294 = vand.u32 %v56, 4294901760
    %v295 = vsub.f32 %v56, %v294
    %296 = vmatpush1.msra.mxu0 %v295
    %297 = vmatprep.subr.mxu0 0.0
    %v298 = vand.u32 %v57, 4294901760
    %v299 = vsub.f32 %v57, %v298
    %300 = vmatpush1.msra.mxu0 %v299
    %301 = vmatprep.subr.mxu0 0.0
    %v302 = vand.u32 %v58, 4294901760
    %v303 = vsub.f32 %v58, %v302
    %304 = vmatpush1.msra.mxu0 %v303
    %305 = vmatprep.subr.mxu0 0.0
    %v306 = vand.u32 %v59, 4294901760
    %v307 = vsub.f32 %v59, %v306
    %308 = vmatpush1.msra.mxu0 %v307
    %309 = vmatprep.subr.mxu0 0.0
    %310 = vmatpush1.msra.mxu0 0.0
    %311 = vmatprep.subr.mxu0 0.0
    %312 = vmatpush1.msra.mxu0 0.0
    %313 = vmatprep.subr.mxu0 0.0
    %314 = vmatpush1.msra.mxu0 0.0
    %315 = vmatprep.subr.mxu0 0.0
    %316 = vmatpush1.msra.mxu0 0.0
    %317 = vmatprep.subr.mxu0 0.0
    %318 = vmatpush1.msra.mxu0 0.0
    %319 = vmatprep.subr.mxu0 0.0
    %320 = vmatpush1.msra.mxu0 0.0
    %321 = vmatprep.subr.mxu0 0.0
    %322 = vmatpush1.msra.mxu0 0.0
    %323 = vmatprep.subr.mxu0 0.0
    %324 = vmatpush1.msra.mxu0 0.0
    %325 = vmatprep.subr.mxu0 0.0
    %326 = vmatpush1.msra.mxu0 0.0
    %327 = vmatprep.subr.mxu0 0.0
    %328 = vmatpush1.msra.mxu0 0.0
    %329 = vmatprep.subr.mxu0 0.0
    %330 = vmatpush1.msra.mxu0 0.0
    %331 = vmatprep.subr.mxu0 0.0
    %332 = vmatpush1.msra.mxu0 0.0
    %333 = vmatprep.subr.mxu0 0.0
    %334 = vmatpush1.msra.mxu0 0.0
    %335 = vmatprep.subr.mxu0 0.0
    %336 = vmatpush1.msra.mxu0 0.0
    %337 = vmatprep.subr.mxu0 0.0
    %338 = vmatpush1.msra.mxu0 0.0
    %339 = vmatprep.subr.mxu0 0.0
    %340 = vmatpush1.msra.mxu0 0.0
    %341 = vmatprep.subr.mxu0 0.0
    %342 = vmatpush1.msra.mxu0 0.0
    %343 = vmatprep.subr.mxu0 0.0
    %344 = vmatpush1.msra.mxu0 0.0
    %345 = vmatprep.subr.mxu0 0.0
    %346 = vmatpush1.msra.mxu0 0.0
    %347 = vmatprep.subr.mxu0 0.0
    %348 = vmatpush1.msra.mxu0 0.0
    %349 = vmatprep.subr.mxu0 0.0
    %350 = vmatpush1.msra.mxu0 0.0
    %351 = vmatprep.subr.mxu0 0.0
    %352 = vmatpush1.msra.mxu0 0.0
    %353 = vmatprep.subr.mxu0 0.0
    %354 = vmatpush1.msra.mxu0 0.0
    %355 = vmatprep.subr.mxu0 0.0
    %356 = vmatpush1.msra.mxu0 0.0
    %357 = vmatprep.mubr.f32.mxu0 0.0
    %v358 = vand.u32 %v62, 4294901760
    %v359 = vsub.f32 %v62, %v358
    %360 = vmatmul.mubr.f32.gmra.mrb[0].mxu0 %v359
    %v361 = vpop.f32.mrb[0].mxu0
    %v362 = vadd.f32 %v268, %v361
    %v363 = vpop.f32.mrb[0].mxu0
    %364 = vmatprep.mubr.f32.mxu0 0.0
    %v365 = vand.u32 %v65, 4294901760
    %v366 = vsub.f32 %v65, %v365
    %367 = vmatmul.mubr.f32.gmra.mrb[0].mxu0 %v366
    %v368 = vpop.f32.mrb[0].mxu0
    %v369 = vadd.f32 %v274, %v368
    %v370 = vpop.f32.mrb[0].mxu0
    %371 = vdwg.mxu0
    %372 = vmatprep.subr.mxu0 0.0
    %v373 = vand.u32 %v52, 4294901760
    %374 = vmatpush1.msra.mxu0 %v373
    %375 = vmatprep.subr.mxu0 0.0
    %v376 = vand.u32 %v53, 4294901760
    %377 = vmatpush1.msra.mxu0 %v376
    %378 = vmatprep.subr.mxu0 0.0
    %v379 = vand.u32 %v54, 4294901760
    %380 = vmatpush1.msra.mxu0 %v379
    %381 = vmatprep.subr.mxu0 0.0
    %v382 = vand.u32 %v55, 4294901760
    %383 = vmatpush1.msra.mxu0 %v382
    %384 = vmatprep.subr.mxu0 0.0
    %v385 = vand.u32 %v56, 4294901760
    %386 = vmatpush1.msra.mxu0 %v385
    %387 = vmatprep.subr.mxu0 0.0
    %v388 = vand.u32 %v57, 4294901760
    %389 = vmatpush1.msra.mxu0 %v388
    %390 = vmatprep.subr.mxu0 0.0
    %v391 = vand.u32 %v58, 4294901760
    %392 = vmatpush1.msra.mxu0 %v391
    %393 = vmatprep.subr.mxu0 0.0
    %v394 = vand.u32 %v59, 4294901760
    %395 = vmatpush1.msra.mxu0 %v394
    %396 = vmatprep.subr.mxu0 0.0
    %397 = vmatpush1.msra.mxu0 0.0
    %398 = vmatprep.subr.mxu0 0.0
    %399 = vmatpush1.msra.mxu0 0.0
    %400 = vmatprep.subr.mxu0 0.0
    %401 = vmatpush1.msra.mxu0 0.0
    %402 = vmatprep.subr.mxu0 0.0
    %403 = vmatpush1.msra.mxu0 0.0
    %404 = vmatprep.subr.mxu0 0.0
    %405 = vmatpush1.msra.mxu0 0.0
    %406 = vmatprep.subr.mxu0 0.0
    %407 = vmatpush1.msra.mxu0 0.0
    %408 = vmatprep.subr.mxu0 0.0
    %409 = vmatpush1.msra.mxu0 0.0
    %410 = vmatprep.subr.mxu0 0.0
    %411 = vmatpush1.msra.mxu0 0.0
    %412 = vmatprep.subr.mxu0 0.0
    %413 = vmatpush1.msra.mxu0 0.0
    %414 = vmatprep.subr.mxu0 0.0
    %415 = vmatpush1.msra.mxu0 0.0
    %416 = vmatprep.subr.mxu0 0.0
    %417 = vmatpush1.msra.mxu0 0.0
    %418 = vmatprep.subr.mxu0 0.0
    %419 = vmatpush1.msra.mxu0 0.0
    %420 = vmatprep.subr.mxu0 0.0
    %421 = vmatpush1.msra.mxu0 0.0
    %422 = vmatprep.subr.mxu0 0.0
    %423 = vmatpush1.msra.mxu0 0.0
    %424 = vmatprep.subr.mxu0 0.0
    %425 = vmatpush1.msra.mxu0 0.0
    %426 = vmatprep.subr.mxu0 0.0
    %427 = vmatpush1.msra.mxu0 0.0
    %428 = vmatprep.subr.mxu0 0.0
    %429 = vmatpush1.msra.mxu0 0.0
    %430 = vmatprep.subr.mxu0 0.0
    %431 = vmatpush1.msra.mxu0 0.0
    %432 = vmatprep.subr.mxu0 0.0
    %433 = vmatpush1.msra.mxu0 0.0
    %434 = vmatprep.subr.mxu0 0.0
    %435 = vmatpush1.msra.mxu0 0.0
    %436 = vmatprep.subr.mxu0 0.0
    %437 = vmatpush1.msra.mxu0 0.0
    %438 = vmatprep.subr.mxu0 0.0
    %439 = vmatpush1.msra.mxu0 0.0
    %440 = vmatprep.subr.mxu0 0.0
    %441 = vmatpush1.msra.mxu0 0.0
    %442 = vmatprep.subr.mxu0 0.0
    %443 = vmatpush1.msra.mxu0 0.0
    %444 = vmatprep.mubr.f32.mxu0 0.0
    %v445 = vand.u32 %v62, 4294901760
    %v446 = vsub.f32 %v62, %v445
    %v447 = vand.u32 %v446, 4294901760
    %448 = vmatmul.mubr.f32.gmra.mrb[0].mxu0 %v447
    %v449 = vpop.f32.mrb[0].mxu0
    %v450 = vadd.f32 %v362, %v449
    %v451 = vpop.f32.mrb[0].mxu0
    %452 = vmatprep.mubr.f32.mxu0 0.0
    %v453 = vand.u32 %v65, 4294901760
    %v454 = vsub.f32 %v65, %v453
    %v455 = vand.u32 %v454, 4294901760
    %456 = vmatmul.mubr.f32.gmra.mrb[0].mxu0 %v455
    %v457 = vpop.f32.mrb[0].mxu0
    %v458 = vadd.f32 %v369, %v457
    %v459 = vpop.f32.mrb[0].mxu0
    %460 = vdwg.mxu0
    %461 = vmatprep.subr.mxu0 0.0
    %v462 = vand.u32 %v52, 4294901760
    %v463 = vsub.f32 %v52, %v462
    %v464 = vand.u32 %v463, 4294901760
    %465 = vmatpush1.msra.mxu0 %v464
    %466 = vmatprep.subr.mxu0 0.0
    %v467 = vand.u32 %v53, 4294901760
    %v468 = vsub.f32 %v53, %v467
    %v469 = vand.u32 %v468, 4294901760
    %470 = vmatpush1.msra.mxu0 %v469
    %471 = vmatprep.subr.mxu0 0.0
    %v472 = vand.u32 %v54, 4294901760
    %v473 = vsub.f32 %v54, %v472
    %v474 = vand.u32 %v473, 4294901760
    %475 = vmatpush1.msra.mxu0 %v474
    %476 = vmatprep.subr.mxu0 0.0
    %v477 = vand.u32 %v55, 4294901760
    %v478 = vsub.f32 %v55, %v477
    %v479 = vand.u32 %v478, 4294901760
    %480 = vmatpush1.msra.mxu0 %v479
    %481 = vmatprep.subr.mxu0 0.0
    %v482 = vand.u32 %v56, 4294901760
    %v483 = vsub.f32 %v56, %v482
    %v484 = vand.u32 %v483, 4294901760
    %485 = vmatpush1.msra.mxu0 %v484
    %486 = vmatprep.subr.mxu0 0.0
    %v487 = vand.u32 %v57, 4294901760
    %v488 = vsub.f32 %v57, %v487
    %v489 = vand.u32 %v488, 4294901760
    %490 = vmatpush1.msra.mxu0 %v489
    %491 = vmatprep.subr.mxu0 0.0
    %v492 = vand.u32 %v58, 4294901760
    %v493 = vsub.f32 %v58, %v492
    %v494 = vand.u32 %v493, 4294901760
    %495 = vmatpush1.msra.mxu0 %v494
    %496 = vmatprep.subr.mxu0 0.0
    %v497 = vand.u32 %v59, 4294901760
    %v498 = vsub.f32 %v59, %v497
    %v499 = vand.u32 %v498, 4294901760
    %500 = vmatpush1.msra.mxu0 %v499
    %501 = vmatprep.subr.mxu0 0.0
    %502 = vmatpush1.msra.mxu0 0.0
    %503 = vmatprep.subr.mxu0 0.0
    %504 = vmatpush1.msra.mxu0 0.0
    %505 = vmatprep.subr.mxu0 0.0
    %506 = vmatpush1.msra.mxu0 0.0
    %507 = vmatprep.subr.mxu0 0.0
    %508 = vmatpush1.msra.mxu0 0.0
    %509 = vmatprep.subr.mxu0 0.0
    %510 = vmatpush1.msra.mxu0 0.0
    %511 = vmatprep.subr.mxu0 0.0
    %512 = vmatpush1.msra.mxu0 0.0
    %513 = vmatprep.subr.mxu0 0.0
    %514 = vmatpush1.msra.mxu0 0.0
    %515 = vmatprep.subr.mxu0 0.0
    %516 = vmatpush1.msra.mxu0 0.0
    %517 = vmatprep.subr.mxu0 0.0
    %518 = vmatpush1.msra.mxu0 0.0
    %519 = vmatprep.subr.mxu0 0.0
    %520 = vmatpush1.msra.mxu0 0.0
    %521 = vmatprep.subr.mxu0 0.0
    %522 = vmatpush1.msra.mxu0 0.0
    %523 = vmatprep.subr.mxu0 0.0
    %524 = vmatpush1.msra.mxu0 0.0
    %525 = vmatprep.subr.mxu0 0.0
    %526 = vmatpush1.msra.mxu0 0.0
    %527 = vmatprep.subr.mxu0 0.0
    %528 = vmatpush1.msra.mxu0 0.0
    %529 = vmatprep.subr.mxu0 0.0
    %530 = vmatpush1.msra.mxu0 0.0
    %531 = vmatprep.subr.mxu0 0.0
    %532 = vmatpush1.msra.mxu0 0.0
    %533 = vmatprep.subr.mxu0 0.0
    %534 = vmatpush1.msra.mxu0 0.0
    %535 = vmatprep.subr.mxu0 0.0
    %536 = vmatpush1.msra.mxu0 0.0
    %537 = vmatprep.subr.mxu0 0.0
    %538 = vmatpush1.msra.mxu0 0.0
    %539 = vmatprep.subr.mxu0 0.0
    %540 = vmatpush1.msra.mxu0 0.0
    %541 = vmatprep.subr.mxu0 0.0
    %542 = vmatpush1.msra.mxu0 0.0
    %543 = vmatprep.subr.mxu0 0.0
    %544 = vmatpush1.msra.mxu0 0.0
    %545 = vmatprep.subr.mxu0 0.0
    %546 = vmatpush1.msra.mxu0 0.0
    %547 = vmatprep.subr.mxu0 0.0
    %548 = vmatpush1.msra.mxu0 0.0
    %549 = vmatprep.mubr.f32.mxu0 0.0
    %v550 = vand.u32 %v62, 4294901760
    %551 = vmatmul.mubr.f32.gmra.mrb[0].mxu0 %v550
    %v552 = vpop.f32.mrb[0].mxu0
    %v553 = vadd.f32 %v450, %v552
    %v554 = vpop.f32.mrb[0].mxu0
    %555 = vmatprep.mubr.f32.mxu0 0.0
    %v556 = vand.u32 %v65, 4294901760
    %557 = vmatmul.mubr.f32.gmra.mrb[0].mxu0 %v556
    %v558 = vpop.f32.mrb[0].mxu0
    %v559 = vadd.f32 %v458, %v558
    %v560 = vpop.f32.mrb[0].mxu0
    %561 = vdwg.mxu0
    %562 = vmatprep.subr.mxu0 0.0
    %v563 = vand.u32 %v52, 4294901760
    %564 = vmatpush1.msra.mxu0 %v563
    %565 = vmatprep.subr.mxu0 0.0
    %v566 = vand.u32 %v53, 4294901760
    %567 = vmatpush1.msra.mxu0 %v566
    %568 = vmatprep.subr.mxu0 0.0
    %v569 = vand.u32 %v54, 4294901760
    %570 = vmatpush1.msra.mxu0 %v569
    %571 = vmatprep.subr.mxu0 0.0
    %v572 = vand.u32 %v55, 4294901760
    %573 = vmatpush1.msra.mxu0 %v572
    %574 = vmatprep.subr.mxu0 0.0
    %v575 = vand.u32 %v56, 4294901760
    %576 = vmatpush1.msra.mxu0 %v575
    %577 = vmatprep.subr.mxu0 0.0
    %v578 = vand.u32 %v57, 4294901760
    %579 = vmatpush1.msra.mxu0 %v578
    %580 = vmatprep.subr.mxu0 0.0
    %v581 = vand.u32 %v58, 4294901760
    %582 = vmatpush1.msra.mxu0 %v581
    %583 = vmatprep.subr.mxu0 0.0
    %v584 = vand.u32 %v59, 4294901760
    %585 = vmatpush1.msra.mxu0 %v584
    %586 = vmatprep.subr.mxu0 0.0
    %587 = vmatpush1.msra.mxu0 0.0
    %588 = vmatprep.subr.mxu0 0.0
    %589 = vmatpush1.msra.mxu0 0.0
    %590 = vmatprep.subr.mxu0 0.0
    %591 = vmatpush1.msra.mxu0 0.0
    %592 = vmatprep.subr.mxu0 0.0
    %593 = vmatpush1.msra.mxu0 0.0
    %594 = vmatprep.subr.mxu0 0.0
    %595 = vmatpush1.msra.mxu0 0.0
    %596 = vmatprep.subr.mxu0 0.0
    %597 = vmatpush1.msra.mxu0 0.0
    %598 = vmatprep.subr.mxu0 0.0
    %599 = vmatpush1.msra.mxu0 0.0
    %600 = vmatprep.subr.mxu0 0.0
    %601 = vmatpush1.msra.mxu0 0.0
    %602 = vmatprep.subr.mxu0 0.0
    %603 = vmatpush1.msra.mxu0 0.0
    %604 = vmatprep.subr.mxu0 0.0
    %605 = vmatpush1.msra.mxu0 0.0
    %606 = vmatprep.subr.mxu0 0.0
    %607 = vmatpush1.msra.mxu0 0.0
    %608 = vmatprep.subr.mxu0 0.0
    %609 = vmatpush1.msra.mxu0 0.0
    %610 = vmatprep.subr.mxu0 0.0
    %611 = vmatpush1.msra.mxu0 0.0
    %612 = vmatprep.subr.mxu0 0.0
    %613 = vmatpush1.msra.mxu0 0.0
    %614 = vmatprep.subr.mxu0 0.0
    %615 = vmatpush1.msra.mxu0 0.0
    %616 = vmatprep.subr.mxu0 0.0
    %617 = vmatpush1.msra.mxu0 0.0
    %618 = vmatprep.subr.mxu0 0.0
    %619 = vmatpush1.msra.mxu0 0.0
    %620 = vmatprep.subr.mxu0 0.0
    %621 = vmatpush1.msra.mxu0 0.0
    %622 = vmatprep.subr.mxu0 0.0
    %623 = vmatpush1.msra.mxu0 0.0
    %624 = vmatprep.subr.mxu0 0.0
    %625 = vmatpush1.msra.mxu0 0.0
    %626 = vmatprep.subr.mxu0 0.0
    %627 = vmatpush1.msra.mxu0 0.0
    %628 = vmatprep.subr.mxu0 0.0
    %629 = vmatpush1.msra.mxu0 0.0
    %630 = vmatprep.subr.mxu0 0.0
    %631 = vmatpush1.msra.mxu0 0.0
    %632 = vmatprep.subr.mxu0 0.0
    %633 = vmatpush1.msra.mxu0 0.0
    %634 = vmatprep.mubr.f32.mxu0 0.0
    %v635 = vand.u32 %v62, 4294901760
    %636 = vmatmul.mubr.f32.gmra.mrb[0].mxu0 %v635
    %v637 = vpop.f32.mrb[0].mxu0
    %v638 = vadd.f32 %v553, %v637
    %v639 = vpop.f32.mrb[0].mxu0
    %640 = vmatprep.mubr.f32.mxu0 0.0
    %v641 = vand.u32 %v65, 4294901760
    %642 = vmatmul.mubr.f32.gmra.mrb[0].mxu0 %v641
    %v643 = vpop.f32.mrb[0].mxu0
    %v644 = vadd.f32 %v559, %v643
    %v645 = vpop.f32.mrb[0].mxu0
    %646 = vdwg.mxu0
    %v647 = vadd.f32 %v50, %v638
    %v648 = vadd.f32 %v51, %v644
    %649 = vst [vmem:[#allocation2] sm:$0xff] %v647
    %650 = vst [vmem:[#allocation2 + $0x8] sm:$0xff] %v648
    // Predicated region
    $region18: #{tpu_custom_call.1} parent=1 // pred_check
      %p651 = pneg %p26
    $region19: #{tpu_custom_call.1} parent=1 // pred_check_branch
      %653 = sbr.rel (%p651) target = $region21
    $region20: #{tpu_custom_call.1} parent=1 // pred_region
      %v654 = vld [vmem:[#allocation2] sm:$0xff]
      %v655 = vld [vmem:[#allocation2 + $0x8] sm:$0xff]
      %656 = vst [vmem:[#allocation6] sm:$0xff] %v654
      %657 = vst [vmem:[#allocation6 + $0x8] sm:$0xff] %v655
    $region21: #{tpu_custom_call.1} parent=1 // pred_fallthru
      _
    // Predicated region
    $region22: #{tpu_custom_call.1} parent=1 // pred_check
      _
    $region23: #{tpu_custom_call.1} parent=1 // pred_check_branch
      %659 = sbr.rel (0) target = $region25
    $region24: #{tpu_custom_call.1} parent=1 // pred_region
      %s661 = ssub.s32 256, 256
      %662 = vsyncadd [#allocation5], %s661
      %s663 = sshll.u32 [#allocation6], 4
      %s664 = int_to_ptr.vmem [resolvable:$true] %s663
      %669 = dma.vmem_to_hbm [thread:$0]  %s664, 256, %s2, [#allocation5], 128, 128, 8
    $region25: #{tpu_custom_call.1} parent=1 // pred_fallthru
      _
    // Predicated region
    $region26: #{tpu_custom_call.1} parent=1 // pred_check
      _
    $region27: #{tpu_custom_call.1} parent=1 // pred_check_branch
      %671 = sbr.rel (0) target = $region29
    $region28: #{tpu_custom_call.1} parent=1 // pred_region
      %672 = dma.done [#allocation5], 256
    $region29: #{tpu_custom_call.1} parent=1 // pred_fallthru
      _
    %673 = vsyncpa [#allocation4], 1
    %674 = vsyncpa [#allocation5], 1

</llo_original>
